<compile_context>
chip_gen: v6e
topology: v6e:2x2x1
jax: 0.10.0
libtpu: 0.0.40
codegen_flags: <defaults>
</compile_context>

<pallas_src>
import functools

import jax
import jax.numpy as jnp
from jax.experimental import pallas as pl
from jax.experimental.pallas import tpu as pltpu

_LANE = 128      # f32 lane width
_SUBLANE = 8     # f32 sublanes per vreg


def _round_up(x, m):
    return (x + m - 1) // m * m


def _recurrent_scaled_masked_kernel(x_ref, wh_ref, bh_ref, wi_ref, wo_ref,
                                    bo_ref, out_ref, *, layers):
    """One grid step = one batch tile through the whole recurrence + head.

    x_ref  : [TB, D]   f32 input tile                              (VMEM)
    wh_ref : [Hp, Hp]  bf16 masked hiddenWeight.weight^T * scalar  (VMEM, resident)
    bh_ref : [1,  Hp]  f32  hiddenWeight.bias * scalar             (VMEM)
    wi_ref : [D,  Hp]  bf16 masked inputWeight.weight^T * scalar   (VMEM, resident)
    wo_ref : [Hp, Op]  bf16 outputLayer.weight^T                   (VMEM, resident)
    bo_ref : [1,  Op]  f32  outputLayer.bias                       (VMEM)
    out_ref: [TB, Op]  f32  relu(outputLayer(u_final))             (VMEM)
    """
    # Loop-invariant input projection; scalar is already folded into wi / bh.
    x_bf = x_ref[...].astype(jnp.bfloat16)
    x_proj = (jnp.dot(x_bf, wi_ref[...], preferred_element_type=jnp.float32)
              + bh_ref[...])

    if layers <= 0:
        u = jnp.zeros(x_proj.shape, jnp.float32)
    else:
        # Initial hidden state is zero, so layer 0 reduces to tanh(x_proj).
        u = jnp.tanh(x_proj)
        # `layers` is a small compile-time constant: fully unroll so the LLO
        # scheduler overlaps MXU push/drain with the tanh (EUP) chain.
        for _ in range(layers - 1):
            u = jnp.tanh(
                jnp.dot(u.astype(jnp.bfloat16), wh_ref[...],
                        preferred_element_type=jnp.float32) + x_proj)

    # Fused output head: Linear(H, 2) + ReLU (lane-dense padded slab).
    y = (jnp.dot(u.astype(jnp.bfloat16), wo_ref[...],
                 preferred_element_type=jnp.float32) + bo_ref[...])
    out_ref[...] = jnp.maximum(y, 0.0).astype(out_ref.dtype)


def prepare_params(wh, bh, wi, wo, bo, scalar, weight_mask, diag_mask):
    """One-time parameter prep: apply forward masks, fold the scalar into the
    recurrence weights/bias, transpose, zero-pad hidden/output dims to
    MXU/lane-friendly shapes, and cast MXU operands to bf16.
    Do this at module-init time (re-run if `scalar` / weights change)."""
    H = wh.shape[0]
    D = wi.shape[1]
    O = wo.shape[0]
    assert wh.shape == (H, H) and bh.shape == (H,)
    assert weight_mask.shape == wh.shape and diag_mask.shape == wi.shape
    assert wo.shape == (O, H) and bo.shape == (O,)

    Hp = _round_up(H, _LANE)
    Op = _round_up(O, _LANE)
    s = jnp.asarray(scalar, jnp.float32).reshape(-1)[0]

    # Forward-pass effect of the masks: zero the masked-out weight entries.
    wh_m = jnp.where(weight_mask.astype(bool), wh.astype(jnp.float32), 0.0)
    wi_m = jnp.where(diag_mask.astype(bool), wi.astype(jnp.float32), 0.0)

    # Fold scalar:  tanh((u Wh + bh + x Wi) * s) == tanh(u(Wh s) + bh s + x(Wi s)).
    # Transpose so the kernel does plain `u @ W`; zero-pad hidden/output dims
    # so padded lanes stay at tanh(0) = 0 and never contaminate real outputs.
    wh_t = jnp.pad(wh_m.T * s, ((0, Hp - H), (0, Hp - H))).astype(jnp.bfloat16)
    wi_t = jnp.pad(wi_m.T * s, ((0, 0), (0, Hp - H))).astype(jnp.bfloat16)  # K = D unpadded
    bh2d = jnp.pad((bh.astype(jnp.float32) * s).reshape(1, H),
                   ((0, 0), (0, Hp - H)))
    wo_t = jnp.pad(wo.astype(jnp.float32).T,
                   ((0, Hp - H), (0, Op - O))).astype(jnp.bfloat16)
    bo2d = jnp.pad(bo.astype(jnp.float32).reshape(1, O), ((0, 0), (0, Op - O)))

    return {
        "wh_t": wh_t, "bh": bh2d, "wi_t": wi_t,
        "wo_t": wo_t, "bo": bo2d,
        "dims": (H, D, O, Hp, Op),
    }


def recurrent_scaled_masked(x, params, *, layers, block_b=1024):
    """Forward pass.  x: [B, D_in] -> y: [B, 2]."""
    H, D, O, Hp, Op = params["dims"]
    B = x.shape[0]
    assert x.shape[1] == D

    # Batch tile: multiple of 8 sublanes, capped at block_b.  Cap at
    # ~ceil(B/2) so the grid has >= 2 tiles whenever possible (both v7x
    # TensorCores get work under dimension_semantics=("parallel",)); large
    # tiles amortize the ~0.35 us/step overhead and MXU weight pushes.
    tb_cap = _round_up(block_b, _SUBLANE)
    half_b = _round_up(-(-B // 2), _SUBLANE)
    TB = max(_SUBLANE, min(tb_cap, half_b))
    Bp = _round_up(B, TB)

    # Pad only the batch dim (feature dim stays unpadded: block dim == array dim).
    x_p = x.astype(jnp.float32)
    if Bp != B:
        x_p = jnp.pad(x_p, ((0, Bp - B), (0, 0)))

    kernel = functools.partial(_recurrent_scaled_masked_kernel, layers=layers)

    # Advisory cost hint for XLA's scheduler around the custom call.
    n_rec = max(layers - 1, 0)
    cost = pl.CostEstimate(
        flops=2 * Bp * Hp * (D + n_rec * Hp + Op),
        transcendentals=Bp * Hp * max(layers, 0),
        bytes_accessed=(Bp * D * 4 + Bp * Op * 4
                        + (Hp * Hp + D * Hp + Hp * Op) * 2 + (Hp + Op) * 4),
    )

    out = pl.pallas_call(
        kernel,
        out_shape=jax.ShapeDtypeStruct((Bp, Op), jnp.float32),
        grid=(Bp // TB,),
        in_specs=[
            pl.BlockSpec((TB, D), lambda i: (i, 0)),    # x tile (D unpadded)
            pl.BlockSpec((Hp, Hp), lambda i: (0, 0)),   # (Wh*s)^T bf16 (resident)
            pl.BlockSpec((1, Hp),  lambda i: (0, 0)),   # bh*s
            pl.BlockSpec((D, Hp),  lambda i: (0, 0)),   # (Wi*s)^T bf16 (resident)
            pl.BlockSpec((Hp, Op), lambda i: (0, 0)),   # Wout^T bf16 (resident)
            pl.BlockSpec((1, Op),  lambda i: (0, 0)),   # bout
        ],
        out_specs=pl.BlockSpec((TB, Op), lambda i: (i, 0)),
        compiler_params=pltpu.CompilerParams(
            dimension_semantics=("parallel",)),   # v7x: shard batch over 2 TCs
        cost_estimate=cost,
    )(x_p, params["wh_t"], params["bh"], params["wi_t"],
      params["wo_t"], params["bo"])

    return out[:B, :O]


def _reference(x, wh, bh, wi, wo, bo, scalar, weight_mask, diag_mask, *, layers):
    """Pure-JAX f32 replica of the PyTorch forward, for verification."""
    wh_m = jnp.where(weight_mask.astype(bool), wh, 0.0)
    wi_m = jnp.where(diag_mask.astype(bool), wi, 0.0)
    B, H = x.shape[0], wh.shape[0]
    u = jnp.zeros((B, H), jnp.float32)
    for _ in range(layers):
        v = u @ wh_m.T + bh + x @ wi_m.T
        u = jnp.tanh(v * scalar[0])
    y = u @ wo.T + bo
    return jnp.maximum(y, 0.0)


if __name__ == "__main__":
    # Small shapes consistent with the module.  The original masks are
    # (hidden, hidden) and index inputWeight.weight, so D_in == hidden.
    B, hidden, D_in, D_out, layers = 4, 32, 32, 2, 3

    key = jax.random.PRNGKey(0)
    k_x, k_wh, k_bh, k_wi, k_wo, k_bo = jax.random.split(key, 6)

    # Deterministic parameter init (PyTorch-Linear-style uniform bounds).
    bound_h = 1.0 / jnp.sqrt(hidden)
    bound_i = 1.0 / jnp.sqrt(D_in)
    wh = jax.random.uniform(k_wh, (hidden, hidden), jnp.float32, -bound_h, bound_h)
    bh = jax.random.uniform(k_bh, (hidden,), jnp.float32, -bound_h, bound_h)
    wi = jax.random.uniform(k_wi, (hidden, D_in), jnp.float32, -bound_i, bound_i)
    wo = jax.random.uniform(k_wo, (D_out, hidden), jnp.float32, -bound_h, bound_h)
    bo = jax.random.uniform(k_bo, (D_out,), jnp.float32, -bound_h, bound_h)
    scalar = jnp.ones((1,), jnp.float32) * 5.0       # nn.Parameter(ones(1)*5)

    # TODO(synk): generateSquareWeightMask is not provided in the spec; build
    # deterministic stand-in masks (banded neighbourhood + diagonal) in-script.
    idx = jnp.arange(hidden)
    weight_mask = (jnp.abs(idx[:, None] - idx[None, :]) <= 2).astype(jnp.uint8)
    diag_mask = jnp.eye(hidden, D_in, dtype=jnp.uint8)

    x = jax.random.normal(k_x, (B, D_in), jnp.float32)

    params = prepare_params(wh, bh, wi, wo, bo, scalar, weight_mask, diag_mask)
    out = recurrent_scaled_masked(x, params, layers=layers)
    out = jax.block_until_ready(out)

    ref = _reference(x, wh, bh, wi, wo, bo, scalar, weight_mask, diag_mask,
                     layers=layers)
    assert out.shape == (B, D_out)
    # bf16 MXU operands (f32 accumulation): compare against the f32 reference
    # with a bf16-appropriate tolerance.
    assert jnp.allclose(out, ref, atol=5e-2, rtol=5e-2)

    print("KERNEL_OK")
</pallas_src>

<mosaic_0001>
module attributes {stable_mosaic.version = 11 : i64} {
  func.func @_recurrent_scaled_masked_kernel(%arg0: i32, %arg1: memref<8x32xf32, #tpu.memory_space<vmem>>, %arg2: memref<128x128xbf16, #tpu.memory_space<vmem>>, %arg3: memref<1x128xf32, #tpu.memory_space<vmem>>, %arg4: memref<32x128xbf16, #tpu.memory_space<vmem>>, %arg5: memref<128x128xbf16, #tpu.memory_space<vmem>>, %arg6: memref<1x128xf32, #tpu.memory_space<vmem>>, %arg7: memref<8x128xf32, #tpu.memory_space<vmem>>) attributes {dimension_semantics = [#tpu.dimension_semantics<parallel>], iteration_bounds = array<i64: 1>, scalar_prefetch = 0 : i64, scratch_operands = 0 : i64, tpu.core_type = #tpu.core_type<tc>, window_params = [{transform_indices = @transform_0, window_bounds = array<i64: 8, 32>}, {pipeline_mode = #tpu.pipeline_mode<synchronous>, transform_indices = @transform_1, window_bounds = array<i64: 128, 128>}, {pipeline_mode = #tpu.pipeline_mode<synchronous>, transform_indices = @transform_2, window_bounds = array<i64: 1, 128>}, {pipeline_mode = #tpu.pipeline_mode<synchronous>, transform_indices = @transform_3, window_bounds = array<i64: 32, 128>}, {pipeline_mode = #tpu.pipeline_mode<synchronous>, transform_indices = @transform_4, window_bounds = array<i64: 128, 128>}, {pipeline_mode = #tpu.pipeline_mode<synchronous>, transform_indices = @transform_5, window_bounds = array<i64: 1, 128>}, {transform_indices = @transform_6, window_bounds = array<i64: 8, 128>}]} {
    %c0 = arith.constant 0 : index
    %c0_0 = arith.constant 0 : index
    %0 = vector.load %arg1[%c0, %c0_0] : memref<8x32xf32, #tpu.memory_space<vmem>>, vector<8x32xf32>
    %1 = arith.truncf %0 : vector<8x32xf32> to vector<8x32xbf16>
    %c0_1 = arith.constant 0 : index
    %c0_2 = arith.constant 0 : index
    %2 = vector.load %arg4[%c0_1, %c0_2] : memref<32x128xbf16, #tpu.memory_space<vmem>>, vector<32x128xbf16>
    %cst = arith.constant dense<0.000000e+00> : vector<8x128xf32>
    %3 = tpu.matmul %1, %2, %cst {dimension_numbers = #tpu.dot_dimension_numbers<[1], [0], [0], [1], [0, 0, 1, 1], [], []>} : vector<8x32xbf16>, vector<32x128xbf16>, vector<8x128xf32> -> vector<8x128xf32>
    %c0_3 = arith.constant 0 : index
    %c0_4 = arith.constant 0 : index
    %4 = vector.load %arg3[%c0_3, %c0_4] : memref<1x128xf32, #tpu.memory_space<vmem>>, vector<1x128xf32>
    %5 = vector.broadcast %4 : vector<1x128xf32> to vector<8x128xf32>
    %6 = arith.addf %3, %5 : vector<8x128xf32>
    %7 = math.tanh %6 : vector<8x128xf32>
    %8 = arith.truncf %7 : vector<8x128xf32> to vector<8x128xbf16>
    %c0_5 = arith.constant 0 : index
    %c0_6 = arith.constant 0 : index
    %9 = vector.load %arg2[%c0_5, %c0_6] : memref<128x128xbf16, #tpu.memory_space<vmem>>, vector<128x128xbf16>
    %cst_7 = arith.constant dense<0.000000e+00> : vector<8x128xf32>
    %10 = tpu.matmul %8, %9, %cst_7 {dimension_numbers = #tpu.dot_dimension_numbers<[1], [0], [0], [1], [0, 0, 1, 1], [], []>} : vector<8x128xbf16>, vector<128x128xbf16>, vector<8x128xf32> -> vector<8x128xf32>
    %11 = arith.addf %10, %6 : vector<8x128xf32>
    %12 = math.tanh %11 : vector<8x128xf32>
    %13 = arith.truncf %12 : vector<8x128xf32> to vector<8x128xbf16>
    %c0_8 = arith.constant 0 : index
    %c0_9 = arith.constant 0 : index
    %14 = vector.load %arg2[%c0_8, %c0_9] : memref<128x128xbf16, #tpu.memory_space<vmem>>, vector<128x128xbf16>
    %cst_10 = arith.constant dense<0.000000e+00> : vector<8x128xf32>
    %15 = tpu.matmul %13, %14, %cst_10 {dimension_numbers = #tpu.dot_dimension_numbers<[1], [0], [0], [1], [0, 0, 1, 1], [], []>} : vector<8x128xbf16>, vector<128x128xbf16>, vector<8x128xf32> -> vector<8x128xf32>
    %16 = arith.addf %15, %6 : vector<8x128xf32>
    %17 = math.tanh %16 : vector<8x128xf32>
    %18 = arith.truncf %17 : vector<8x128xf32> to vector<8x128xbf16>
    %c0_11 = arith.constant 0 : index
    %c0_12 = arith.constant 0 : index
    %19 = vector.load %arg5[%c0_11, %c0_12] : memref<128x128xbf16, #tpu.memory_space<vmem>>, vector<128x128xbf16>
    %cst_13 = arith.constant dense<0.000000e+00> : vector<8x128xf32>
    %20 = tpu.matmul %18, %19, %cst_13 {dimension_numbers = #tpu.dot_dimension_numbers<[1], [0], [0], [1], [0, 0, 1, 1], [], []>} : vector<8x128xbf16>, vector<128x128xbf16>, vector<8x128xf32> -> vector<8x128xf32>
    %c0_14 = arith.constant 0 : index
    %c0_15 = arith.constant 0 : index
    %21 = vector.load %arg6[%c0_14, %c0_15] : memref<1x128xf32, #tpu.memory_space<vmem>>, vector<1x128xf32>
    %22 = vector.broadcast %21 : vector<1x128xf32> to vector<8x128xf32>
    %23 = arith.addf %20, %22 : vector<8x128xf32>
    %cst_16 = arith.constant 0.000000e+00 : f32
    %24 = vector.broadcast %cst_16 : f32 to vector<8x128xf32>
    %25 = arith.maximumf %23, %24 : vector<8x128xf32>
    %c0_17 = arith.constant 0 : index
    %c0_18 = arith.constant 0 : index
    %26 = vector.load %arg7[%c0_17, %c0_18] : memref<8x128xf32, #tpu.memory_space<vmem>>, vector<8x128xf32>
    tpu.vector_store %arg7[%c0_17, %c0_18], %25 {strides = array<i32>} : memref<8x128xf32, #tpu.memory_space<vmem>>, vector<8x128xf32>,
    return
  }
  func.func @transform_0(%arg0: i32) -> (i32, i32) {
    %c0_i32 = arith.constant 0 : i32
    %c0_i32_0 = arith.constant 0 : i32
    return %arg0, %c0_i32 : i32, i32
  }
  func.func @transform_1(%arg0: i32) -> (i32, i32) {
    %c0_i32 = arith.constant 0 : i32
    %c0_i32_0 = arith.constant 0 : i32
    %c0_i32_1 = arith.constant 0 : i32
    return %c0_i32, %c0_i32_0 : i32, i32
  }
  func.func @transform_2(%arg0: i32) -> (i32, i32) {
    %c0_i32 = arith.constant 0 : i32
    %c0_i32_0 = arith.constant 0 : i32
    %c0_i32_1 = arith.constant 0 : i32
    return %c0_i32, %c0_i32_0 : i32, i32
  }
  func.func @transform_3(%arg0: i32) -> (i32, i32) {
    %c0_i32 = arith.constant 0 : i32
    %c0_i32_0 = arith.constant 0 : i32
    %c0_i32_1 = arith.constant 0 : i32
    return %c0_i32, %c0_i32_0 : i32, i32
  }
  func.func @transform_4(%arg0: i32) -> (i32, i32) {
    %c0_i32 = arith.constant 0 : i32
    %c0_i32_0 = arith.constant 0 : i32
    %c0_i32_1 = arith.constant 0 : i32
    return %c0_i32, %c0_i32_0 : i32, i32
  }
  func.func @transform_5(%arg0: i32) -> (i32, i32) {
    %c0_i32 = arith.constant 0 : i32
    %c0_i32_0 = arith.constant 0 : i32
    %c0_i32_1 = arith.constant 0 : i32
    return %c0_i32, %c0_i32_0 : i32, i32
  }
  func.func @transform_6(%arg0: i32) -> (i32, i32) {
    %c0_i32 = arith.constant 0 : i32
    %c0_i32_0 = arith.constant 0 : i32
    return %arg0, %c0_i32 : i32, i32
  }
}

</mosaic_0001>

<llo_original>
// kernel: tpu_custom_call.1
$region0: #{tpu_custom_call.1}
  #allocation0 [shape = 'u32[]', space=smem, size = 0x4, offset = 0x4, fixed_abs, tag = 'smem constant byte address 0x4 - core index']
  #allocation1 [shape = 'u32[144,128]{1,0:T(1,128)}', space=vmem, size = 0x12000, scoped, tag = 'internal scratch']
  %s0 = inlined_call_operand.hbm [shape: f32[8,32], index: 0, kind: input, shape index: {}]
  %s1 = inlined_call_operand.hbm [shape: bf16[128,128], index: 1, kind: input, shape index: {}]
  %s2 = inlined_call_operand.vmem [shape: f32[1,128], index: 2, kind: input, shape index: {}]
  %s3 = inlined_call_operand.hbm [shape: bf16[32,128], index: 3, kind: input, shape index: {}]
  %s4 = inlined_call_operand.hbm [shape: bf16[128,128], index: 4, kind: input, shape index: {}]
  %s5 = inlined_call_operand.vmem [shape: f32[1,128], index: 5, kind: input, shape index: {}]
  %s6 = inlined_call_operand.hbm [shape: f32[8,128], index: 6, kind: output, shape index: {}]
  %s7 = sld [smem:[#allocation0]]
  $region50: #{tpu_custom_call.1} parent=0
    _
  %s9 = ssub.s32 1, %s7
  %s10 = scalar_select 0, %s9, %s7
  $region1: #{tpu_custom_call.1} parent=0
    #allocation2 [shape = 'u8[4096]{0}', space=vmem, size = 0x1000, scoped, tag = 'input window, operand 0, single buffered']
    #allocation3 [shape = 's32[1]{0}', space=sflag, size = 0x4, scoped, tag = 'scoped memory for tpu_custom_call.1']
    #allocation4 [shape = 's32[1]{0}', space=sflag, size = 0x4, scoped, tag = 'scoped memory for tpu_custom_call.1']
    #allocation5 [shape = 'u8[32768]{0}', space=vmem, size = 0x8000, scoped, tag = 'input window, operand 1, single buffered']
    #allocation6 [shape = 's32[1]{0}', space=sflag, size = 0x4, scoped, tag = 'scoped memory for tpu_custom_call.1']
    #allocation7 [shape = 'u8[8192]{0}', space=vmem, size = 0x2000, scoped, tag = 'input window, operand 3, single buffered']
    #allocation8 [shape = 'u8[32768]{0}', space=vmem, size = 0x8000, scoped, tag = 'input window, operand 4, single buffered']
    #allocation9 [shape = 's32[1]{0}', space=sflag, size = 0x4, scoped, tag = 'scoped memory for tpu_custom_call.1']
    #allocation10 [shape = 'u8[4096]{0}', space=vmem, size = 0x1000, scoped, tag = 'output window, operand 0, single buffered']
    %11 = vsyncpa [#allocation3], 0
    %12 = vsyncpa [#allocation6], 0
    %13 = vsyncpa [#allocation9], 0
    %14 = vsyncpa [#allocation4], 0
    // Predicated region
    $region2: #{tpu_custom_call.1} parent=1 // pred_check
      _
    $region3: #{tpu_custom_call.1} parent=1 // pred_check_branch
      %16 = sbr.rel (0) target = $region5
    $region4: #{tpu_custom_call.1} parent=1 // pred_region
      %s18 = ssub.s32 128, 128
      %19 = vsyncadd [#allocation3], %s18
      %s21 = sshll.u32 [#allocation2], 4
      %s22 = int_to_ptr.vmem [resolvable:$true] %s21
      %24 = dma.hbm_to_vmem [thread:$0]  %s0, 128, %s22, [#allocation3]
    $region5: #{tpu_custom_call.1} parent=1 // pred_fallthru
      _
    // Predicated region
    $region6: #{tpu_custom_call.1} parent=1 // pred_check
      _
    $region7: #{tpu_custom_call.1} parent=1 // pred_check_branch
      %26 = sbr.rel (0) target = $region9
    $region8: #{tpu_custom_call.1} parent=1 // pred_region
      %s28 = ssub.s32 1024, 1024
      %29 = vsyncadd [#allocation6], %s28
      %s30 = sshll.u32 [#allocation5], 4
      %s31 = int_to_ptr.vmem [resolvable:$true] %s30
      %36 = dma.hbm_to_vmem [thread:$0]  %s1, 1024, %s31, [#allocation6], 64, 64, 4
    $region9: #{tpu_custom_call.1} parent=1 // pred_fallthru
      _
    // Predicated region
    $region10: #{tpu_custom_call.1} parent=1 // pred_check
      _
    $region11: #{tpu_custom_call.1} parent=1 // pred_check_branch
      %38 = sbr.rel (0) target = $region13
    $region12: #{tpu_custom_call.1} parent=1 // pred_region
      _
    $region13: #{tpu_custom_call.1} parent=1 // pred_fallthru
      _
    // Predicated region
    $region14: #{tpu_custom_call.1} parent=1 // pred_check
      _
    $region15: #{tpu_custom_call.1} parent=1 // pred_check_branch
      %40 = sbr.rel (0) target = $region17
    $region16: #{tpu_custom_call.1} parent=1 // pred_region
      %s42 = ssub.s32 256, 256
      %43 = vsyncadd [#allocation6], %s42
      %s44 = sshll.u32 [#allocation7], 4
      %s45 = int_to_ptr.vmem [resolvable:$true] %s44
      %50 = dma.hbm_to_vmem [thread:$0]  %s3, 256, %s45, [#allocation6], 64, 64, 4
    $region17: #{tpu_custom_call.1} parent=1 // pred_fallthru
      _
    // Predicated region
    $region18: #{tpu_custom_call.1} parent=1 // pred_check
      _
    $region19: #{tpu_custom_call.1} parent=1 // pred_check_branch
      %52 = sbr.rel (0) target = $region21
    $region20: #{tpu_custom_call.1} parent=1 // pred_region
      %s54 = ssub.s32 1024, 1024
      %55 = vsyncadd [#allocation9], %s54
      %s56 = sshll.u32 [#allocation8], 4
      %s57 = int_to_ptr.vmem [resolvable:$true] %s56
      %62 = dma.hbm_to_vmem [thread:$0]  %s4, 1024, %s57, [#allocation9], 64, 64, 4
    $region21: #{tpu_custom_call.1} parent=1 // pred_fallthru
      _
    // Predicated region
    $region22: #{tpu_custom_call.1} parent=1 // pred_check
      _
    $region23: #{tpu_custom_call.1} parent=1 // pred_check_branch
      %64 = sbr.rel (0) target = $region25
    $region24: #{tpu_custom_call.1} parent=1 // pred_region
      _
    $region25: #{tpu_custom_call.1} parent=1 // pred_fallthru
      _
    // Predicated region
    $region26: #{tpu_custom_call.1} parent=1 // pred_check
      _
    $region27: #{tpu_custom_call.1} parent=1 // pred_check_branch
      %66 = sbr.rel (0) target = $region29
    $region28: #{tpu_custom_call.1} parent=1 // pred_region
      %67 = dma.done [#allocation3], 128
    $region29: #{tpu_custom_call.1} parent=1 // pred_fallthru
      _
    // Predicated region
    $region30: #{tpu_custom_call.1} parent=1 // pred_check
      _
    $region31: #{tpu_custom_call.1} parent=1 // pred_check_branch
      %69 = sbr.rel (0) target = $region33
    $region32: #{tpu_custom_call.1} parent=1 // pred_region
      %70 = dma.done [#allocation6], 1024
    $region33: #{tpu_custom_call.1} parent=1 // pred_fallthru
      _
    // Predicated region
    $region34: #{tpu_custom_call.1} parent=1 // pred_check
      _
    $region35: #{tpu_custom_call.1} parent=1 // pred_check_branch
      %72 = sbr.rel (0) target = $region37
    $region36: #{tpu_custom_call.1} parent=1 // pred_region
      %73 = dma.done [#allocation6], 256
    $region37: #{tpu_custom_call.1} parent=1 // pred_fallthru
      _
    // Predicated region
    $region38: #{tpu_custom_call.1} parent=1 // pred_check
      _
    $region39: #{tpu_custom_call.1} parent=1 // pred_check_branch
      %75 = sbr.rel (0) target = $region41
    $region40: #{tpu_custom_call.1} parent=1 // pred_region
      %76 = dma.done [#allocation9], 1024
    $region41: #{tpu_custom_call.1} parent=1 // pred_fallthru
      _
    %v78 = vld [vmem:[#allocation2] sm:$0xff]
    %v79 = vpack.c.bf16 %v78, %v78
    %v80 = vld [vmem:[#allocation7] sm:$0xf]
    %v81 = vld [vmem:[#allocation7 + $0x4] sm:$0xf]
    %v82 = vld [vmem:[#allocation7 + $0x8] sm:$0xf]
    %v83 = vld [vmem:[#allocation7 + $0xc] sm:$0xf]
    %v84 = vld [vmem:[%s2] sm:$0x1]
    %v86 = vlaneseq
    %v87 = vshrl.u32 %v86, 7
    %v88 = vsub.s32 0, %v87
    %v89 = vrot.slane %v84, %v88
    %v95 = vunpack.c.l.b16 %v80
    %v96 = vunpack.c.l.b16 %v81
    %v97 = vunpack.c.l.b16 %v82
    %v98 = vunpack.c.l.b16 %v83
    %v99 = vpack.c.b16 %v96, %v95
    %v100 = vpack.c.b16 %v98, %v97
    %vm103 = vcmask 261120
    %v105 = vsel %vm103, %v79, 0
    %107 = vmatprep.subr.bf16.mxu0 0
    %108 = vmatpush1.bf16.msra.mxu0 0
    %109 = vmatprep.subr.bf16.mxu0 0
    %110 = vmatpush1.bf16.msra.mxu0 0
    %111 = vmatprep.subr.bf16.mxu0 0
    %112 = vmatpush1.bf16.msra.mxu0 0
    %113 = vmatprep.subr.bf16.mxu0 0
    %114 = vmatpush1.bf16.msra.mxu0 0
    %115 = vmatprep.subr.bf16.mxu0 0
    %116 = vmatpush1.bf16.msra.mxu0 0
    %117 = vmatprep.subr.bf16.mxu0 0
    %118 = vmatpush1.bf16.msra.mxu0 0
    %119 = vmatprep.subr.bf16.mxu0 0
    %120 = vmatpush1.bf16.msra.mxu0 %v100
    %121 = vmatprep.subr.bf16.mxu0 0
    %122 = vmatpush1.bf16.msra.mxu0 %v99
    %123 = vmatprep.subr.bf16.mxu0 0
    %124 = vmatpush2.bf16.msra.mxu0 0
    %125 = vmatprep.subr.bf16.mxu0 0
    %126 = vmatpush2.bf16.msra.mxu0 0
    %127 = vmatprep.subr.bf16.mxu0 0
    %128 = vmatpush2.bf16.msra.mxu0 0
    %129 = vmatprep.subr.bf16.mxu0 0
    %130 = vmatpush2.bf16.msra.mxu0 0
    %131 = vmatprep.subr.bf16.mxu0 0
    %132 = vmatpush2.bf16.msra.mxu0 0
    %133 = vmatprep.subr.bf16.mxu0 0
    %134 = vmatpush2.bf16.msra.mxu0 0
    %135 = vmatprep.subr.bf16.mxu0 0
    %136 = vmatpush2.bf16.msra.mxu0 0
    %137 = vmatprep.subr.bf16.mxu0 0
    %138 = vmatpush2.bf16.msra.mxu0 0
    %139 = vmatprep.mubr.bf16.mxu0 0
    %140 = vmatmul.mubr.bf16.gmra.mxu0 %v105
    %v141 = vpop.f32.mrf.mxu0
    %v142 = vadd.f32 %v89, %v141
    %v143 = vpop.f32.mrf.mxu0
    %v144 = vpop.f32.mrf.mxu0
    %v145 = vpop.f32.mrf.mxu0
    %146 = vdwg.mxu0
    %v147 = vtanh.pop %v142
    %v148 = vpack.c.bf16 %v147, %v147
    %v149 = vld [vmem:[#allocation5] sm:$0xf]
    %v150 = vld [vmem:[#allocation5 + $0x4] sm:$0xf]
    %v151 = vld [vmem:[#allocation5 + $0x8] sm:$0xf]
    %v152 = vld [vmem:[#allocation5 + $0xc] sm:$0xf]
    %v153 = vld [vmem:[#allocation5 + $0x10] sm:$0xf]
    %v154 = vld [vmem:[#allocation5 + $0x14] sm:$0xf]
    %v155 = vld [vmem:[#allocation5 + $0x18] sm:$0xf]
    %v156 = vld [vmem:[#allocation5 + $0x1c] sm:$0xf]
    %v157 = vld [vmem:[#allocation5 + $0x20] sm:$0xf]
    %v158 = vld [vmem:[#allocation5 + $0x24] sm:$0xf]
    %v159 = vld [vmem:[#allocation5 + $0x28] sm:$0xf]
    %v160 = vld [vmem:[#allocation5 + $0x2c] sm:$0xf]
    %v161 = vld [vmem:[#allocation5 + $0x30] sm:$0xf]
    %v162 = vld [vmem:[#allocation5 + $0x34] sm:$0xf]
    %v163 = vld [vmem:[#allocation5 + $0x38] sm:$0xf]
    %v164 = vld [vmem:[#allocation5 + $0x3c] sm:$0xf]
    %v181 = vunpack.c.l.b16 %v149
    %v182 = vunpack.c.l.b16 %v150
    %v183 = vunpack.c.l.b16 %v151
    %v184 = vunpack.c.l.b16 %v152
    %v185 = vunpack.c.l.b16 %v153
    %v186 = vunpack.c.l.b16 %v154
    %v187 = vunpack.c.l.b16 %v155
    %v188 = vunpack.c.l.b16 %v156
    %v189 = vunpack.c.l.b16 %v157
    %v190 = vunpack.c.l.b16 %v158
    %v191 = vunpack.c.l.b16 %v159
    %v192 = vunpack.c.l.b16 %v160
    %v193 = vunpack.c.l.b16 %v161
    %v194 = vunpack.c.l.b16 %v162
    %v195 = vunpack.c.l.b16 %v163
    %v196 = vunpack.c.l.b16 %v164
    %v197 = vpack.c.b16 %v182, %v181
    %v198 = vpack.c.b16 %v184, %v183
    %v199 = vpack.c.b16 %v186, %v185
    %v200 = vpack.c.b16 %v188, %v187
    %v201 = vpack.c.b16 %v190, %v189
    %v202 = vpack.c.b16 %v192, %v191
    %v203 = vpack.c.b16 %v194, %v193
    %v204 = vpack.c.b16 %v196, %v195
    %213 = vmatprep.subr.bf16.mxu0 0
    %214 = vmatpush1.bf16.msra.mxu0 %v204
    %215 = vmatprep.subr.bf16.mxu0 0
    %216 = vmatpush1.bf16.msra.mxu0 %v203
    %217 = vmatprep.subr.bf16.mxu0 0
    %218 = vmatpush1.bf16.msra.mxu0 %v202
    %219 = vmatprep.subr.bf16.mxu0 0
    %220 = vmatpush1.bf16.msra.mxu0 %v201
    %221 = vmatprep.subr.bf16.mxu0 0
    %222 = vmatpush1.bf16.msra.mxu0 %v200
    %223 = vmatprep.subr.bf16.mxu0 0
    %224 = vmatpush1.bf16.msra.mxu0 %v199
    %225 = vmatprep.subr.bf16.mxu0 0
    %226 = vmatpush1.bf16.msra.mxu0 %v198
    %227 = vmatprep.subr.bf16.mxu0 0
    %228 = vmatpush1.bf16.msra.mxu0 %v197
    %229 = vmatprep.subr.bf16.mxu0 0
    %230 = vmatpush2.bf16.msra.mxu0 0
    %231 = vmatprep.subr.bf16.mxu0 0
    %232 = vmatpush2.bf16.msra.mxu0 0
    %233 = vmatprep.subr.bf16.mxu0 0
    %234 = vmatpush2.bf16.msra.mxu0 0
    %235 = vmatprep.subr.bf16.mxu0 0
    %236 = vmatpush2.bf16.msra.mxu0 0
    %237 = vmatprep.subr.bf16.mxu0 0
    %238 = vmatpush2.bf16.msra.mxu0 0
    %239 = vmatprep.subr.bf16.mxu0 0
    %240 = vmatpush2.bf16.msra.mxu0 0
    %241 = vmatprep.subr.bf16.mxu0 0
    %242 = vmatpush2.bf16.msra.mxu0 0
    %243 = vmatprep.subr.bf16.mxu0 0
    %244 = vmatpush2.bf16.msra.mxu0 0
    %245 = vmatprep.mubr.bf16.mxu0 0
    %246 = vmatmul.mubr.bf16.gmra.mxu0 %v148
    %v247 = vpop.f32.mrf.mxu0
    %v248 = vadd.f32 %v142, %v247
    %v249 = vpop.f32.mrf.mxu0
    %v250 = vpop.f32.mrf.mxu0
    %v251 = vpop.f32.mrf.mxu0
    %252 = vdwg.mxu0
    %v253 = vtanh.pop %v248
    %v254 = vpack.c.bf16 %v253, %v253
    %255 = vmatprep.subr.bf16.mxu0 0
    %256 = vmatpush1.bf16.msra.mxu0 %v204
    %257 = vmatprep.subr.bf16.mxu0 0
    %258 = vmatpush1.bf16.msra.mxu0 %v203
    %259 = vmatprep.subr.bf16.mxu0 0
    %260 = vmatpush1.bf16.msra.mxu0 %v202
    %261 = vmatprep.subr.bf16.mxu0 0
    %262 = vmatpush1.bf16.msra.mxu0 %v201
    %263 = vmatprep.subr.bf16.mxu0 0
    %264 = vmatpush1.bf16.msra.mxu0 %v200
    %265 = vmatprep.subr.bf16.mxu0 0
    %266 = vmatpush1.bf16.msra.mxu0 %v199
    %267 = vmatprep.subr.bf16.mxu0 0
    %268 = vmatpush1.bf16.msra.mxu0 %v198
    %269 = vmatprep.subr.bf16.mxu0 0
    %270 = vmatpush1.bf16.msra.mxu0 %v197
    %271 = vmatprep.subr.bf16.mxu0 0
    %272 = vmatpush2.bf16.msra.mxu0 0
    %273 = vmatprep.subr.bf16.mxu0 0
    %274 = vmatpush2.bf16.msra.mxu0 0
    %275 = vmatprep.subr.bf16.mxu0 0
    %276 = vmatpush2.bf16.msra.mxu0 0
    %277 = vmatprep.subr.bf16.mxu0 0
    %278 = vmatpush2.bf16.msra.mxu0 0
    %279 = vmatprep.subr.bf16.mxu0 0
    %280 = vmatpush2.bf16.msra.mxu0 0
    %281 = vmatprep.subr.bf16.mxu0 0
    %282 = vmatpush2.bf16.msra.mxu0 0
    %283 = vmatprep.subr.bf16.mxu0 0
    %284 = vmatpush2.bf16.msra.mxu0 0
    %285 = vmatprep.subr.bf16.mxu0 0
    %286 = vmatpush2.bf16.msra.mxu0 0
    %287 = vmatprep.mubr.bf16.mxu0 0
    %288 = vmatmul.mubr.bf16.gmra.mxu0 %v254
    %v289 = vpop.f32.mrf.mxu0
    %v290 = vadd.f32 %v142, %v289
    %v291 = vpop.f32.mrf.mxu0
    %v292 = vpop.f32.mrf.mxu0
    %v293 = vpop.f32.mrf.mxu0
    %294 = vdwg.mxu0
    %v295 = vtanh.pop %v290
    %v296 = vpack.c.bf16 %v295, %v295
    %v297 = vld [vmem:[#allocation8] sm:$0xf]
    %v298 = vld [vmem:[#allocation8 + $0x4] sm:$0xf]
    %v299 = vld [vmem:[#allocation8 + $0x8] sm:$0xf]
    %v300 = vld [vmem:[#allocation8 + $0xc] sm:$0xf]
    %v301 = vld [vmem:[#allocation8 + $0x10] sm:$0xf]
    %v302 = vld [vmem:[#allocation8 + $0x14] sm:$0xf]
    %v303 = vld [vmem:[#allocation8 + $0x18] sm:$0xf]
    %v304 = vld [vmem:[#allocation8 + $0x1c] sm:$0xf]
    %v305 = vld [vmem:[#allocation8 + $0x20] sm:$0xf]
    %v306 = vld [vmem:[#allocation8 + $0x24] sm:$0xf]
    %v307 = vld [vmem:[#allocation8 + $0x28] sm:$0xf]
    %v308 = vld [vmem:[#allocation8 + $0x2c] sm:$0xf]
    %v309 = vld [vmem:[#allocation8 + $0x30] sm:$0xf]
    %v310 = vld [vmem:[#allocation8 + $0x34] sm:$0xf]
    %v311 = vld [vmem:[#allocation8 + $0x38] sm:$0xf]
    %v312 = vld [vmem:[#allocation8 + $0x3c] sm:$0xf]
    %v313 = vld [vmem:[%s5] sm:$0x1]
    %v315 = vlaneseq
    %v316 = vshrl.u32 %v315, 7
    %v317 = vsub.s32 0, %v316
    %v318 = vrot.slane %v313, %v317
    %v336 = vunpack.c.l.b16 %v297
    %v337 = vunpack.c.l.b16 %v298
    %v338 = vunpack.c.l.b16 %v299
    %v339 = vunpack.c.l.b16 %v300
    %v340 = vunpack.c.l.b16 %v301
    %v341 = vunpack.c.l.b16 %v302
    %v342 = vunpack.c.l.b16 %v303
    %v343 = vunpack.c.l.b16 %v304
    %v344 = vunpack.c.l.b16 %v305
    %v345 = vunpack.c.l.b16 %v306
    %v346 = vunpack.c.l.b16 %v307
    %v347 = vunpack.c.l.b16 %v308
    %v348 = vunpack.c.l.b16 %v309
    %v349 = vunpack.c.l.b16 %v310
    %v350 = vunpack.c.l.b16 %v311
    %v351 = vunpack.c.l.b16 %v312
    %v352 = vpack.c.b16 %v337, %v336
    %v353 = vpack.c.b16 %v339, %v338
    %v354 = vpack.c.b16 %v341, %v340
    %v355 = vpack.c.b16 %v343, %v342
    %v356 = vpack.c.b16 %v345, %v344
    %v357 = vpack.c.b16 %v347, %v346
    %v358 = vpack.c.b16 %v349, %v348
    %v359 = vpack.c.b16 %v351, %v350
    %368 = vmatprep.subr.bf16.mxu0 0
    %369 = vmatpush1.bf16.msra.mxu0 %v359
    %370 = vmatprep.subr.bf16.mxu0 0
    %371 = vmatpush1.bf16.msra.mxu0 %v358
    %372 = vmatprep.subr.bf16.mxu0 0
    %373 = vmatpush1.bf16.msra.mxu0 %v357
    %374 = vmatprep.subr.bf16.mxu0 0
    %375 = vmatpush1.bf16.msra.mxu0 %v356
    %376 = vmatprep.subr.bf16.mxu0 0
    %377 = vmatpush1.bf16.msra.mxu0 %v355
    %378 = vmatprep.subr.bf16.mxu0 0
    %379 = vmatpush1.bf16.msra.mxu0 %v354
    %380 = vmatprep.subr.bf16.mxu0 0
    %381 = vmatpush1.bf16.msra.mxu0 %v353
    %382 = vmatprep.subr.bf16.mxu0 0
    %383 = vmatpush1.bf16.msra.mxu0 %v352
    %384 = vmatprep.subr.bf16.mxu0 0
    %385 = vmatpush2.bf16.msra.mxu0 0
    %386 = vmatprep.subr.bf16.mxu0 0
    %387 = vmatpush2.bf16.msra.mxu0 0
    %388 = vmatprep.subr.bf16.mxu0 0
    %389 = vmatpush2.bf16.msra.mxu0 0
    %390 = vmatprep.subr.bf16.mxu0 0
    %391 = vmatpush2.bf16.msra.mxu0 0
    %392 = vmatprep.subr.bf16.mxu0 0
    %393 = vmatpush2.bf16.msra.mxu0 0
    %394 = vmatprep.subr.bf16.mxu0 0
    %395 = vmatpush2.bf16.msra.mxu0 0
    %396 = vmatprep.subr.bf16.mxu0 0
    %397 = vmatpush2.bf16.msra.mxu0 0
    %398 = vmatprep.subr.bf16.mxu0 0
    %399 = vmatpush2.bf16.msra.mxu0 0
    %400 = vmatprep.mubr.bf16.mxu0 0
    %401 = vmatmul.mubr.bf16.gmra.mxu0 %v296
    %v402 = vpop.f32.mrf.mxu0
    %v403 = vadd.f32 %v318, %v402
    %v404 = vpop.f32.mrf.mxu0
    %v405 = vpop.f32.mrf.mxu0
    %v406 = vpop.f32.mrf.mxu0
    %407 = vdwg.mxu0
    %v408 = vmax.f32 %v403, 0.0
    %409 = vst [vmem:[#allocation10] sm:$0xff] %v408
    // Predicated region
    $region42: #{tpu_custom_call.1} parent=1 // pred_check
      _
    $region43: #{tpu_custom_call.1} parent=1 // pred_check_branch
      %411 = sbr.rel (0) target = $region45
    $region44: #{tpu_custom_call.1} parent=1 // pred_region
      %s413 = ssub.s32 128, 128
      %414 = vsyncadd [#allocation4], %s413
      %s416 = sshll.u32 [#allocation10], 4
      %s417 = int_to_ptr.vmem [resolvable:$true] %s416
      %419 = dma.vmem_to_hbm [thread:$0]  %s417, 128, %s6, [#allocation4]
    $region45: #{tpu_custom_call.1} parent=1 // pred_fallthru
      _
    // Predicated region
    $region46: #{tpu_custom_call.1} parent=1 // pred_check
      _
    $region47: #{tpu_custom_call.1} parent=1 // pred_check_branch
      %421 = sbr.rel (0) target = $region49
    $region48: #{tpu_custom_call.1} parent=1 // pred_region
      %422 = dma.done [#allocation4], 128
    $region49: #{tpu_custom_call.1} parent=1 // pred_fallthru
      _
    %423 = vsyncpa [#allocation3], 1
    %424 = vsyncpa [#allocation6], 1
    %425 = vsyncpa [#allocation9], 1
    %426 = vsyncpa [#allocation4], 1

</llo_original>
